<compile_context>
chip_gen: v7x
topology: tpu7x:2x2x1
jax: 0.10.0
libtpu: 0.0.40
codegen_flags: <defaults>
</compile_context>

<pallas_src>
import functools

import jax
import jax.numpy as jnp
from jax.experimental import pallas as pl
from jax.experimental.pallas import tpu as pltpu

B = 8       # batch (number of triplets) — spec example shape
D = 128     # embedding dim (lane-dense: one full 128-lane vreg row / example)
MARGIN = 1.0

# Scale-up gating: below this batch size a grid is pure per-step overhead.
_GRID_MIN_BATCH = 1024
# Rows per grid step: >=512 rows reaches ~85% of HBM roofline for tiled
# elementwise work; VMEM footprint (with double buffering) ~1.5 MiB.
_GRID_BLOCK_B = 512


# ====================== grid-free kernel (small batch) =====================
def _triplet_loss_kernel(a_ref, p_ref, n_ref, loss_ref, *, margin, batch):
    """(B, D) x3 in VMEM -> scalar mean triplet loss in SMEM (1, 1)."""
    a = a_ref[...].astype(jnp.float32)   # no-op for f32; needed for bf16 (v5e)
    p = p_ref[...].astype(jnp.float32)
    n = n_ref[...].astype(jnp.float32)

    dp = a - p
    dn = a - n
    # Single fused cross-lane reduce: pos_dist - neg_dist == sum(dp^2 - dn^2).
    diff = jnp.sum(dp * dp - dn * dn, axis=1, keepdims=True)       # (B, 1)
    per_example = jnp.maximum(diff + margin, 0.0)                  # (B, 1)

    # Mean over the batch; 1/B is a compile-time constant (no runtime divide).
    loss_ref[0, 0] = jnp.sum(per_example) * (1.0 / batch)


# ===================== gridded kernel (large-batch path) ===================
def _triplet_loss_grid_kernel(a_ref, p_ref, n_ref, loss_ref, acc_ref,
                              *, margin, batch):
    """(TB, D) blocks over the batch; hinge sum accumulated in SMEM scratch."""
    i = pl.program_id(0)

    @pl.when(i == 0)
    def _():
        acc_ref[0, 0] = 0.0

    a = a_ref[...].astype(jnp.float32)
    p = p_ref[...].astype(jnp.float32)
    n = n_ref[...].astype(jnp.float32)

    dp = a - p
    dn = a - n
    diff = jnp.sum(dp * dp - dn * dn, axis=1, keepdims=True)       # (TB, 1)
    hinge = jnp.maximum(diff + margin, 0.0)
    acc_ref[0, 0] += jnp.sum(hinge)

    @pl.when(i == pl.num_programs(0) - 1)
    def _():
        loss_ref[0, 0] = acc_ref[0, 0] * (1.0 / batch)


# ============================== JAX wrapper ================================
def triplet_loss(anchor, positive, negative, margin=MARGIN):
    """Mirrors TripletLoss.forward: (B, D) x3 -> scalar loss."""
    batch, dim = anchor.shape
    out_shape = jax.ShapeDtypeStruct((1, 1), jnp.float32)
    smem_out = pl.BlockSpec(memory_space=pltpu.MemorySpace.SMEM)

    if batch >= _GRID_MIN_BATCH and batch % _GRID_BLOCK_B == 0:
        tb = _GRID_BLOCK_B
        kernel = functools.partial(_triplet_loss_grid_kernel,
                                   margin=margin, batch=batch)
        # TODO(synk): on v7x, split the batch axis across the 2 TensorCores
        # (leading size-2 parallel axis combining two partial sums) once the
        # workload is DMA-bound; single-TC v5e/v6e are unaffected.
        call = pl.pallas_call(
            kernel,
            out_shape=out_shape,
            grid=(batch // tb,),
            in_specs=[pl.BlockSpec((tb, dim), lambda i: (i, 0))] * 3,
            out_specs=smem_out,
            scratch_shapes=[pltpu.SMEM((1, 1), jnp.float32)],
            compiler_params=pltpu.CompilerParams(
                dimension_semantics=("arbitrary",)),
        )
    else:
        kernel = functools.partial(_triplet_loss_kernel,
                                   margin=margin, batch=batch)
        call = pl.pallas_call(
            kernel,
            out_shape=out_shape,
            in_specs=[pl.BlockSpec(memory_space=pltpu.MemorySpace.VMEM)] * 3,
            out_specs=smem_out,
        )

    return call(anchor, positive, negative)[0, 0]


# ================================= main ====================================
if __name__ == "__main__":
    def ref_loss(a, p, n):
        pd = jnp.sum((a - p) ** 2, axis=1)
        nd = jnp.sum((a - n) ** 2, axis=1)
        return jnp.mean(jnp.maximum(pd - nd + MARGIN, 0.0))

    # --- spec-sized check (B=8, D=128): grid-free single launch -------------
    key = jax.random.PRNGKey(0)
    k_a, k_p, k_n = jax.random.split(key, 3)
    anchor = jax.random.normal(k_a, (B, D), jnp.float32)
    positive = jax.random.normal(k_p, (B, D), jnp.float32)
    negative = jax.random.normal(k_n, (B, D), jnp.float32)

    fwd = jax.jit(triplet_loss)
    loss = fwd(anchor, positive, negative)
    jax.block_until_ready(loss)

    ref = ref_loss(anchor, positive, negative)
    assert loss.shape == ()
    assert bool(jnp.isfinite(loss))
    assert float(loss) >= 0.0
    assert bool(jnp.allclose(loss, ref, rtol=1e-4, atol=1e-5)), (float(loss),
                                                                 float(ref))

    # --- scale-up path check (B=1024): gridded + SMEM accumulator -----------
    kb_a, kb_p, kb_n = jax.random.split(jax.random.PRNGKey(1), 3)
    big_a = jax.random.normal(kb_a, (_GRID_MIN_BATCH, D), jnp.float32)
    big_p = jax.random.normal(kb_p, (_GRID_MIN_BATCH, D), jnp.float32)
    big_n = jax.random.normal(kb_n, (_GRID_MIN_BATCH, D), jnp.float32)

    big_loss = jax.jit(triplet_loss)(big_a, big_p, big_n)
    jax.block_until_ready(big_loss)
    big_ref = ref_loss(big_a, big_p, big_n)
    assert bool(jnp.isfinite(big_loss))
    assert float(big_loss) >= 0.0
    assert bool(jnp.allclose(big_loss, big_ref, rtol=1e-4, atol=1e-5)), (
        float(big_loss), float(big_ref))

    print("KERNEL_OK")
</pallas_src>

<mosaic_0001>
module attributes {stable_mosaic.version = 11 : i64} {
  func.func @_triplet_loss_kernel(%arg0: memref<8x128xf32, #tpu.memory_space<vmem>>, %arg1: memref<8x128xf32, #tpu.memory_space<vmem>>, %arg2: memref<8x128xf32, #tpu.memory_space<vmem>>, %arg3: memref<1x1xf32, #tpu.memory_space<smem>>) attributes {dimension_semantics = [], scalar_prefetch = 0 : i64, scratch_operands = 0 : i64, tpu.core_type = #tpu.core_type<tc>} {
    %c0 = arith.constant 0 : index
    %c0_0 = arith.constant 0 : index
    %0 = vector.load %arg0[%c0, %c0_0] : memref<8x128xf32, #tpu.memory_space<vmem>>, vector<8x128xf32>
    %c0_1 = arith.constant 0 : index
    %c0_2 = arith.constant 0 : index
    %1 = vector.load %arg1[%c0_1, %c0_2] : memref<8x128xf32, #tpu.memory_space<vmem>>, vector<8x128xf32>
    %c0_3 = arith.constant 0 : index
    %c0_4 = arith.constant 0 : index
    %2 = vector.load %arg2[%c0_3, %c0_4] : memref<8x128xf32, #tpu.memory_space<vmem>>, vector<8x128xf32>
    %3 = arith.subf %0, %1 : vector<8x128xf32>
    %4 = arith.subf %0, %2 : vector<8x128xf32>
    %5 = arith.mulf %3, %3 : vector<8x128xf32>
    %6 = arith.mulf %4, %4 : vector<8x128xf32>
    %7 = arith.subf %5, %6 : vector<8x128xf32>
    %cst = arith.constant dense<0.000000e+00> : vector<8xf32>
    %8 = vector.multi_reduction <add>, %7, %cst [1] : vector<8x128xf32> to vector<8xf32>
    %9 = vector.shape_cast %8 : vector<8xf32> to vector<8x1xf32>
    %cst_5 = arith.constant 1.000000e+00 : f32
    %10 = vector.broadcast %cst_5 : f32 to vector<8x1xf32>
    %11 = arith.addf %9, %10 : vector<8x1xf32>
    %cst_6 = arith.constant 0.000000e+00 : f32
    %12 = vector.broadcast %cst_6 : f32 to vector<8x1xf32>
    %13 = arith.maximumf %11, %12 : vector<8x1xf32>
    %14 = vector.shape_cast %13 : vector<8x1xf32> to vector<1x8x1xf32>
    %cst_7 = arith.constant dense<0.000000e+00> : vector<1xf32>
    %15 = vector.multi_reduction <add>, %14, %cst_7 [1, 2] : vector<1x8x1xf32> to vector<1xf32>
    %16 = vector.shape_cast %15 : vector<1xf32> to vector<1x1x1xf32>
    %17 = vector.extract %16[0, 0, 0] : f32 from vector<1x1x1xf32>
    %cst_8 = arith.constant 1.250000e-01 : f32
    %18 = arith.mulf %17, %cst_8 : f32
    %c0_9 = arith.constant 0 : index
    %c0_10 = arith.constant 0 : index
    %19 = memref.load %arg3[%c0_9, %c0_10] : memref<1x1xf32, #tpu.memory_space<smem>>
    memref.store %18, %arg3[%c0_9, %c0_10] : memref<1x1xf32, #tpu.memory_space<smem>>
    return
  }
}

</mosaic_0001>

<llo_original>
// kernel: triplet_loss.1
$region0: #{triplet_loss.1}
  #allocation0 [shape = 'u32[]', space=smem, size = 0x4, offset = 0x4, fixed_abs, tag = 'smem constant byte address 0x4 - core index']
  #allocation1 [shape = 'u32[144,128]{1,0:T(1,128)}', space=vmem, size = 0x12000, scoped, tag = 'internal scratch']
  %s0 = inlined_call_operand.hbm [shape: f32[8,128], index: 0, kind: input, shape index: {}]
  %s1 = inlined_call_operand.hbm [shape: f32[8,128], index: 1, kind: input, shape index: {}]
  %s2 = inlined_call_operand.hbm [shape: f32[8,128], index: 2, kind: input, shape index: {}]
  %s3 = inlined_call_operand.hbm [shape: f32[1,1], index: 3, kind: output, shape index: {}]
  %s4 = sld [smem:[#allocation0]]
  $region34: #{triplet_loss.1} parent=0
    _
  %s6 = ssub.s32 1, %s4
  %s7 = scalar_select 0, %s6, %s4
  $region1: #{triplet_loss.1} parent=0
    #allocation2 [shape = 'u8[4096]{0}', space=vmem, size = 0x1000, scoped, tag = 'input window, operand 0, single buffered']
    #allocation3 [shape = 's32[1]{0}', space=sflag, size = 0x4, scoped, tag = 'scoped memory for triplet_loss.1']
    #allocation4 [shape = 's32[1]{0}', space=sflag, size = 0x4, scoped, tag = 'scoped memory for triplet_loss.1']
    #allocation5 [shape = 'u8[4096]{0}', space=vmem, size = 0x1000, scoped, tag = 'input window, operand 1, single buffered']
    #allocation6 [shape = 's32[1]{0}', space=sflag, size = 0x4, scoped, tag = 'scoped memory for triplet_loss.1']
    #allocation7 [shape = 'u8[4096]{0}', space=vmem, size = 0x1000, scoped, tag = 'input window, operand 2, single buffered']
    #allocation8 [shape = 'u8[512]{0}', space=smem, size = 0x200, scoped, tag = 'output window, operand 0, single buffered']
    %8 = vsyncpa [#allocation3], 0
    %9 = vsyncpa [#allocation6], 0
    %10 = vsyncpa [#allocation4], 0
    // Predicated region
    $region2: #{triplet_loss.1} parent=1 // pred_check
      _
    $region3: #{triplet_loss.1} parent=1 // pred_check_branch
      %12 = sbr.rel (0) target = $region5
    $region4: #{triplet_loss.1} parent=1 // pred_region
      %s14 = ssub.s32 128, 128
      %15 = vsyncadd [#allocation3], %s14
      %s17 = sshll.u32 [#allocation2], 4
      %s18 = int_to_ptr.vmem [resolvable:$true] %s17
      %20 = dma.hbm_to_vmem [thread:$0]  %s0, 128, %s18, [#allocation3]
    $region5: #{triplet_loss.1} parent=1 // pred_fallthru
      _
    // Predicated region
    $region6: #{triplet_loss.1} parent=1 // pred_check
      _
    $region7: #{triplet_loss.1} parent=1 // pred_check_branch
      %22 = sbr.rel (0) target = $region9
    $region8: #{triplet_loss.1} parent=1 // pred_region
      %s24 = ssub.s32 128, 128
      %25 = vsyncadd [#allocation6], %s24
      %s27 = sshll.u32 [#allocation5], 4
      %s28 = int_to_ptr.vmem [resolvable:$true] %s27
      %30 = dma.hbm_to_vmem [thread:$0]  %s1, 128, %s28, [#allocation6]
    $region9: #{triplet_loss.1} parent=1 // pred_fallthru
      _
    // Predicated region
    $region10: #{triplet_loss.1} parent=1 // pred_check
      _
    $region11: #{triplet_loss.1} parent=1 // pred_check_branch
      %32 = sbr.rel (0) target = $region13
    $region12: #{triplet_loss.1} parent=1 // pred_region
      %s34 = ssub.s32 128, 128
      %35 = vsyncadd [#allocation6], %s34
      %s37 = sshll.u32 [#allocation7], 4
      %s38 = int_to_ptr.vmem [resolvable:$true] %s37
      %40 = dma.hbm_to_vmem [thread:$0]  %s2, 128, %s38, [#allocation6]
    $region13: #{triplet_loss.1} parent=1 // pred_fallthru
      _
    // Predicated region
    $region14: #{triplet_loss.1} parent=1 // pred_check
      _
    $region15: #{triplet_loss.1} parent=1 // pred_check_branch
      %42 = sbr.rel (0) target = $region17
    $region16: #{triplet_loss.1} parent=1 // pred_region
      %43 = dma.done [#allocation3], 128
    $region17: #{triplet_loss.1} parent=1 // pred_fallthru
      _
    // Predicated region
    $region18: #{triplet_loss.1} parent=1 // pred_check
      _
    $region19: #{triplet_loss.1} parent=1 // pred_check_branch
      %45 = sbr.rel (0) target = $region21
    $region20: #{triplet_loss.1} parent=1 // pred_region
      %46 = dma.done [#allocation6], 128
    $region21: #{triplet_loss.1} parent=1 // pred_fallthru
      _
    // Predicated region
    $region22: #{triplet_loss.1} parent=1 // pred_check
      _
    $region23: #{triplet_loss.1} parent=1 // pred_check_branch
      %48 = sbr.rel (0) target = $region25
    $region24: #{triplet_loss.1} parent=1 // pred_region
      %49 = dma.done [#allocation6], 128
    $region25: #{triplet_loss.1} parent=1 // pred_fallthru
      _
    %v50 = vld [vmem:[#allocation2] sm:$0xff]
    %v51 = vld [vmem:[#allocation5] sm:$0xff]
    %v52 = vld [vmem:[#allocation7] sm:$0xff]
    %v53 = vsub.f32 %v50, %v51
    %v54 = vsub.f32 %v50, %v52
    %v55 = vmul.f32 %v53, %v53
    %v56 = vmul.f32 %v54, %v54
    %v57 = vsub.f32 %v55, %v56
    %58 = vadd.xlane.f32.xlu0 %v57
    %v59 = vpop.xlane.xlu0 %58
    %v60 = vadd.f32 %v59, 1.0
    %v61 = vmax.f32 %v60, 0.0
    %vm62 = vcmask 7168
    %v63 = vsel %vm62, %v61, 0.0
    %64 = vadd.xlane.f32.xlu0 %v63
    %v65 = vpop.xlane.xlu0 %64
    %v66 = vrot.slane %v65, 4
    %v67 = vadd.f32 %v65, %v66
    %v68 = vrot.slane %v67, 2
    %v69 = vadd.f32 %v67, %v68
    %v70 = vrot.slane %v69, 1
    %v71 = vadd.f32 %v69, %v70
    %s72 = vtos %v71
    %s73 = smul.f32 %s72, 0.125
    %s74 = scalar_lea.smem [#allocation8], 0
    %75 = sst [smem:[%s74]] %s73
    // Predicated region
    $region26: #{triplet_loss.1} parent=1 // pred_check
      _
    $region27: #{triplet_loss.1} parent=1 // pred_check_branch
      %77 = sbr.rel (0) target = $region29
    $region28: #{triplet_loss.1} parent=1 // pred_region
      %s79 = ssub.s32 16, 16
      %80 = vsyncadd [#allocation4], %s79
      %83 = dma.smem_to_hbm [#allocation8], 16, %s3, [#allocation4]
    $region29: #{triplet_loss.1} parent=1 // pred_fallthru
      _
    // Predicated region
    $region30: #{triplet_loss.1} parent=1 // pred_check
      _
    $region31: #{triplet_loss.1} parent=1 // pred_check_branch
      %85 = sbr.rel (0) target = $region33
    $region32: #{triplet_loss.1} parent=1 // pred_region
      %86 = dma.done [#allocation4], 16
    $region33: #{triplet_loss.1} parent=1 // pred_fallthru
      _
    %87 = sfence
    %88 = vsyncpa [#allocation3], 1
    %89 = vsyncpa [#allocation6], 1
    %90 = vsyncpa [#allocation4], 1

</llo_original>
